<compile_context>
chip_gen: v7x
topology: tpu7x:2x2x1
jax: 0.10.0
libtpu: 0.0.40
codegen_flags: <defaults>
</compile_context>

<pallas_src>
import jax
import jax.numpy as jnp
from jax.experimental import pallas as pl
from jax.experimental.pallas import tpu as pltpu


# second-to-last-dim (sublane) block multiple per itemsize: f32 / bf16 / int8
_SUBLANE_MULT = {4: 8, 2: 16, 1: 32}
# per-operand tile budget: big enough that each tile's DMA time >> 0.35 us
# step overhead, small enough that 6x tile (2 in + 1 out, double-buffered)
# fits comfortably under v7x's 64 MiB physical VMEM.
_TARGET_TILE_BYTES = 4 << 20


def _xrho2_kernel(c_ref, p2_ref, mu2_ref, rho2_ref):
    # c lives in SMEM as float32: one scalar load + one scalar reciprocal per
    # grid step (scalar unit, effectively free), then a broadcast VPU mul-sub.
    inv_c = 1.0 / c_ref[0]
    p2 = p2_ref[...].astype(jnp.float32)
    mu2 = mu2_ref[...].astype(jnp.float32)
    rho2_ref[...] = (p2 - inv_c * mu2).astype(rho2_ref.dtype)


def _choose_slab(n):
    """Pick a lane-dense (rows, lanes) slab for a flat array of n elements."""
    for lanes in (1024, 512, 256, 128):
        if n % lanes == 0:
            return n // lanes, lanes
    return None  # not 128-divisible


def xrho2_layer(p2: jax.Array, mu2: jax.Array, c, *, block_rows=None) -> jax.Array:
    """Pallas implementation of Xrho2_Layer.forward(p2, mu2, c).

    p2, mu2 : same shape & dtype (any shape; the wrapper flattens batched
              inputs into a lane-dense slab so stores are unmasked `vst`s).
    c       : positive scalar (kept in float32 in SMEM).
    """
    assert p2.shape == mu2.shape, "p2/mu2 shape mismatch"
    assert p2.dtype == mu2.dtype, "p2/mu2 dtype mismatch"
    orig_shape = p2.shape
    dtype = p2.dtype
    itemsize = jnp.dtype(dtype).itemsize
    sub = _SUBLANE_MULT.get(itemsize, 8)
    n = int(p2.size)

    # c stays float32 regardless of p2.dtype: SMEM is a 32-bit scalar path and
    # computing 1/c in bf16 would throw away precision for nothing.
    c_smem = jnp.asarray(c, dtype=jnp.float32).reshape((1,))

    smem_spec = pl.BlockSpec(memory_space=pltpu.MemorySpace.SMEM)
    vmem_spec = pl.BlockSpec(memory_space=pltpu.MemorySpace.VMEM)

    slab = _choose_slab(n)
    use_grid = slab is not None and slab[0] > sub

    if not use_grid:
        # Tiny / oddly-sized inputs (incl. the module's native (1,1)): single
        # resident full-array tile.  Launch/DMA overhead dominates here no
        # matter what; in a real ADMM network fuse this line into the
        # surrounding iteration kernel instead of a standalone pallas_call.
        # TODO(synk): pad-to-128 gridded path for large non-128-divisible inputs.
        p2_2d = p2 if p2.ndim == 2 else p2.reshape(1, n)
        mu2_2d = mu2 if mu2.ndim == 2 else mu2.reshape(1, n)
        out = pl.pallas_call(
            _xrho2_kernel,
            out_shape=jax.ShapeDtypeStruct(p2_2d.shape, dtype),
            in_specs=[smem_spec, vmem_spec, vmem_spec],
            out_specs=vmem_spec,
        )(c_smem, p2_2d, mu2_2d)
        return out.reshape(orig_shape)

    # ---- gridded, lane-dense, double-buffered path ----
    rows, lanes = slab
    p2_2d = p2.reshape(rows, lanes)
    mu2_2d = mu2.reshape(rows, lanes)

    if block_rows is None:
        block_rows = _TARGET_TILE_BYTES // (lanes * itemsize)
    block_rows = max(sub, min(int(block_rows), rows))
    if block_rows < rows:
        # (sub, 128) rule: when the block is not the full array, the row tile
        # must be a multiple of the sublane packing (8 f32 / 16 bf16 / 32 i8).
        block_rows = (block_rows // sub) * sub
    grid = (pl.cdiv(rows, block_rows),)

    tile_bytes = block_rows * lanes * itemsize
    # 2 inputs + 1 output, each double-buffered, plus headroom; cap well under
    # v7x's 64 MiB physical VMEM so the same sizing works on all generations.
    vmem_limit = min(56 << 20, max(16 << 20, int(6.5 * tile_bytes) + (2 << 20)))

    block = pl.BlockSpec((block_rows, lanes), lambda i: (i, 0))
    out = pl.pallas_call(
        _xrho2_kernel,
        out_shape=jax.ShapeDtypeStruct((rows, lanes), dtype),
        grid=grid,
        in_specs=[smem_spec, block, block],
        out_specs=block,
        compiler_params=pltpu.CompilerParams(
            # mem-bound elementwise op: independent row tiles -> let v7x's two
            # TensorCores each take half the grid.
            dimension_semantics=("parallel",),
            vmem_limit_bytes=vmem_limit,
        ),
    )(c_smem, p2_2d, mu2_2d)
    return out.reshape(orig_shape)


if __name__ == "__main__":
    key = jax.random.PRNGKey(0)
    k1, k2, k3, k4, k5 = jax.random.split(key, 5)

    # c is a positive scalar parameter of the ADMM layer.
    c = jnp.abs(jax.random.normal(k3, (), dtype=jnp.float32)) + 0.5
    inv_c = 1.0 / c

    # 1) module's native shape: p2, mu2, rho2 are (1, 1)  -> small/fused path.
    p2 = jax.random.normal(k1, (1, 1), dtype=jnp.float32)
    mu2 = jax.random.normal(k2, (1, 1), dtype=jnp.float32)
    rho2 = xrho2_layer(p2, mu2, c)
    jax.block_until_ready(rho2)
    assert jnp.allclose(rho2, p2 - inv_c * mu2, atol=1e-6, rtol=1e-6)

    # 2) batched (2, 4, 16, 16) -> flattened lane-dense single tile.
    p2b = jax.random.normal(k4, (2, 4, 16, 16), dtype=jnp.float32)
    mu2b = jax.random.normal(k5, (2, 4, 16, 16), dtype=jnp.float32)
    rho2b = xrho2_layer(p2b, mu2b, c)
    jax.block_until_ready(rho2b)
    assert rho2b.shape == p2b.shape
    assert jnp.allclose(rho2b, p2b - inv_c * mu2b, atol=1e-6, rtol=1e-6)

    # 3) modest slab with a forced small row tile -> exercises the real grid
    #    (multi-step, parallel semantics, double-buffered DMA).
    kg1, kg2 = jax.random.split(k4)
    p2g = jax.random.normal(kg1, (64, 512), dtype=jnp.float32)
    mu2g = jax.random.normal(kg2, (64, 512), dtype=jnp.float32)
    rho2g = xrho2_layer(p2g, mu2g, c, block_rows=8)
    jax.block_until_ready(rho2g)
    assert jnp.allclose(rho2g, p2g - inv_c * mu2g, atol=1e-6, rtol=1e-6)

    # 4) bf16 inputs -> sublane multiple of 16 and f32 in-kernel math for 1/c.
    p2h = p2g.astype(jnp.bfloat16)
    mu2h = mu2g.astype(jnp.bfloat16)
    rho2h = xrho2_layer(p2h, mu2h, c, block_rows=16)
    jax.block_until_ready(rho2h)
    ref_h = (p2h.astype(jnp.float32) - inv_c * mu2h.astype(jnp.float32))
    assert jnp.allclose(rho2h.astype(jnp.float32), ref_h, atol=5e-2, rtol=5e-2)

    print("KERNEL_OK")
</pallas_src>

<mosaic_0001>
module attributes {stable_mosaic.version = 11 : i64} {
  func.func @_xrho2_kernel(%arg0: memref<1xf32, #tpu.memory_space<smem>>, %arg1: memref<1x1xf32, #tpu.memory_space<vmem>>, %arg2: memref<1x1xf32, #tpu.memory_space<vmem>>, %arg3: memref<1x1xf32, #tpu.memory_space<vmem>>) attributes {dimension_semantics = [], scalar_prefetch = 0 : i64, scratch_operands = 0 : i64, tpu.core_type = #tpu.core_type<tc>} {
    %c0 = arith.constant 0 : index
    %0 = memref.load %arg0[%c0] : memref<1xf32, #tpu.memory_space<smem>>
    %cst = arith.constant 1.000000e+00 : f32
    %1 = arith.divf %cst, %0 : f32
    %c0_0 = arith.constant 0 : index
    %c0_1 = arith.constant 0 : index
    %2 = vector.load %arg1[%c0_0, %c0_1] : memref<1x1xf32, #tpu.memory_space<vmem>>, vector<1x1xf32>
    %c0_2 = arith.constant 0 : index
    %c0_3 = arith.constant 0 : index
    %3 = vector.load %arg2[%c0_2, %c0_3] : memref<1x1xf32, #tpu.memory_space<vmem>>, vector<1x1xf32>
    %4 = vector.broadcast %1 : f32 to vector<1x1xf32>
    %5 = arith.mulf %4, %3 : vector<1x1xf32>
    %6 = arith.subf %2, %5 : vector<1x1xf32>
    %c0_4 = arith.constant 0 : index
    %c0_5 = arith.constant 0 : index
    %7 = vector.load %arg3[%c0_4, %c0_5] : memref<1x1xf32, #tpu.memory_space<vmem>>, vector<1x1xf32>
    tpu.vector_store %arg3[%c0_4, %c0_5], %6 {strides = array<i32>} : memref<1x1xf32, #tpu.memory_space<vmem>>, vector<1x1xf32>,
    return
  }
}

</mosaic_0001>

<llo_original>
// kernel: tpu_custom_call.1
$region0: #{tpu_custom_call.1}
  #allocation0 [shape = 'u32[]', space=smem, size = 0x4, offset = 0x4, fixed_abs, tag = 'smem constant byte address 0x4 - core index']
  #allocation1 [shape = 'u32[144,128]{1,0:T(1,128)}', space=vmem, size = 0x12000, scoped, tag = 'internal scratch']
  #allocation2 [shape = 'f32[1]{0:T(128)S(6)}', space=smem, size = 0x200, scoped, tag = 'scoped memory for tpu_custom_call.1']
  #allocation3 [shape = 'f32[1,1]{1,0:T(1,128)S(1)}', space=vmem, size = 0x200, scoped, tag = 'scoped memory for tpu_custom_call.1']
  #allocation4 [shape = 'f32[1,1]{1,0:T(1,128)S(1)}', space=vmem, size = 0x200, scoped, tag = 'scoped memory for tpu_custom_call.1']
  %s0 = inlined_call_operand.<no memory space> [shape: f32[1], index: 0, kind: input, shape index: {}]
  %s1 = inlined_call_operand.<no memory space> [shape: f32[1,1], index: 1, kind: input, shape index: {}]
  %s2 = inlined_call_operand.<no memory space> [shape: f32[1,1], index: 2, kind: input, shape index: {}]
  %s3 = inlined_call_operand.hbm [shape: f32[1,1], index: 3, kind: output, shape index: {}]
  %s4 = sld [smem:[#allocation0]]
  $region22: #{tpu_custom_call.1} parent=0
    _
  %s6 = ssub.s32 1, %s4
  %s7 = scalar_select 0, %s6, %s4
  %8 = sst [smem:[#allocation2]] %s0
  %v9 = vstv %s1
  %10 = vst [vmem:[#allocation3] sm:$0x1] %v9
  %v11 = vstv %s2
  %12 = vst [vmem:[#allocation4] sm:$0x1] %v11
  $region1: #{tpu_custom_call.1} parent=0
    #allocation5 [shape = 'u8[512]{0}', space=vmem, size = 0x400, scoped, tag = 'output window, operand 0, single buffered']
    #allocation6 [shape = 's32[1]{0}', space=sflag, size = 0x4, scoped, tag = 'scoped memory for tpu_custom_call.1']
    %13 = vsyncpa [#allocation6], 0
    // Predicated region
    $region2: #{tpu_custom_call.1} parent=1 // pred_check
      _
    $region3: #{tpu_custom_call.1} parent=1 // pred_check_branch
      %15 = sbr.rel (0) target = $region5
    $region4: #{tpu_custom_call.1} parent=1 // pred_region
      _
    $region5: #{tpu_custom_call.1} parent=1 // pred_fallthru
      _
    // Predicated region
    $region6: #{tpu_custom_call.1} parent=1 // pred_check
      _
    $region7: #{tpu_custom_call.1} parent=1 // pred_check_branch
      %17 = sbr.rel (0) target = $region9
    $region8: #{tpu_custom_call.1} parent=1 // pred_region
      _
    $region9: #{tpu_custom_call.1} parent=1 // pred_fallthru
      _
    // Predicated region
    $region10: #{tpu_custom_call.1} parent=1 // pred_check
      _
    $region11: #{tpu_custom_call.1} parent=1 // pred_check_branch
      %19 = sbr.rel (0) target = $region13
    $region12: #{tpu_custom_call.1} parent=1 // pred_region
      _
    $region13: #{tpu_custom_call.1} parent=1 // pred_fallthru
      _
    %s20 = sld [smem:[#allocation2]]
    %v21 = vstv %s20
    %v22 = vrcp.pop %v21
    %s23 = vtos %v22
    %v24 = vld [vmem:[#allocation3] sm:$0x1]
    %v25 = vld [vmem:[#allocation4] sm:$0x1]
    %v26 = vstv %s23
    %v27 = vmul.f32 %v26, %v25
    %v28 = vsub.f32 %v24, %v27
    %vm29 = vcmask 0
    %30 = vst.msk [vmem:[#allocation5] sm:$0x1] %vm29, %v28
    // Predicated region
    $region14: #{tpu_custom_call.1} parent=1 // pred_check
      _
    $region15: #{tpu_custom_call.1} parent=1 // pred_check_branch
      %32 = sbr.rel (0) target = $region17
    $region16: #{tpu_custom_call.1} parent=1 // pred_region
      %s34 = ssub.s32 16, 16
      %35 = vsyncadd [#allocation6], %s34
      %s37 = sshll.u32 [#allocation5], 4
      %s38 = int_to_ptr.vmem [resolvable:$true] %s37
      %40 = dma.vmem_to_hbm [thread:$0]  %s38, 16, %s3, [#allocation6]
    $region17: #{tpu_custom_call.1} parent=1 // pred_fallthru
      _
    // Predicated region
    $region18: #{tpu_custom_call.1} parent=1 // pred_check
      _
    $region19: #{tpu_custom_call.1} parent=1 // pred_check_branch
      %42 = sbr.rel (0) target = $region21
    $region20: #{tpu_custom_call.1} parent=1 // pred_region
      %43 = dma.done [#allocation6], 16
    $region21: #{tpu_custom_call.1} parent=1 // pred_fallthru
      _
    %44 = vsyncpa [#allocation6], 1

</llo_original>
